<compile_context>
chip_gen: v6e
topology: v6e:2x2x1
jax: 0.10.0
libtpu: 0.0.40
codegen_flags: <defaults>
</compile_context>

<pallas_src>
import functools

import jax
import jax.numpy as jnp
from jax import lax
from jax.experimental import pallas as pl
from jax.experimental.pallas import tpu as pltpu


def _round_up(x, m):
    return (x + m - 1) // m * m


def _linear_kernel(x_ref, w_ref, b_ref, o_ref):
    # x_ref: [TC, Kp]  (one batch, TC channels, padded seq_len)
    # w_ref: [Pp, Kp]  (VMEM-resident padded weight)
    # b_ref: [Pp, 1]   (VMEM-resident padded bias, as a column)
    # o_ref: [Pp, TC]  (transposed output tile: pred_len x channels)
    acc = lax.dot_general(
        w_ref[...],
        x_ref[...],
        dimension_numbers=(((1,), (1,)), ((), ())),  # W @ x^T on the MXU
        preferred_element_type=jnp.float32,
    )
    o_ref[...] = (acc + b_ref[...]).astype(o_ref.dtype)


@functools.partial(jax.jit, static_argnames=("force_pallas",))
def linear_model_forward(x, weight, bias, *, force_pallas=False):
    """x: [B, C, seq_len]; weight: [pred_len, seq_len]; bias: [pred_len].

    Returns [B, pred_len, C] (matches the torch module output)."""
    B, C, K = x.shape
    P = weight.shape[0]

    # Tiny problems: a single fused XLA einsum beats pallas_call fixed overhead.
    if not force_pallas and (B * C * K * P) < (1 << 22):
        out = jnp.einsum("bck,pk->bcp", x, weight) + bias
        return jnp.swapaxes(out, 1, 2)

    # Lane-dense padded sizes (multiples of 128 on every lane-mapped dim).
    Kp = _round_up(K, 128)
    Pp = _round_up(P, 128)
    Cp = _round_up(C, 128)
    # Largest channel tile in {512, 256, 128} that divides the padded C
    # (bigger tiles amortize the ~0.35us/step grid overhead without extra pad).
    TC = next(c for c in (512, 256, 128) if Cp % c == 0)

    xp = jnp.pad(x, ((0, 0), (0, Cp - C), (0, Kp - K)))
    wp = jnp.pad(weight, ((0, Pp - P), (0, Kp - K)))
    bp = jnp.pad(bias, (0, Pp - P)).reshape(Pp, 1)

    grid = (B, Cp // TC)

    out_padded = pl.pallas_call(
        _linear_kernel,
        out_shape=jax.ShapeDtypeStruct((B, Pp, Cp), x.dtype),
        grid_spec=pltpu.PrefetchScalarGridSpec(
            num_scalar_prefetch=0,
            grid=grid,
            in_specs=[
                # x tile: one batch, TC channels, full (padded) seq_len.
                pl.BlockSpec((None, TC, Kp), lambda b, c: (b, c, 0)),
                # Weight and bias: constant index -> stay resident in VMEM.
                pl.BlockSpec((Pp, Kp), lambda b, c: (0, 0)),
                pl.BlockSpec((Pp, 1), lambda b, c: (0, 0)),
            ],
            # Transposed output tile: [pred, channel] slab of out[b].
            out_specs=pl.BlockSpec((None, Pp, TC), lambda b, c: (b, 0, c)),
        ),
        compiler_params=pltpu.CompilerParams(
            dimension_semantics=("parallel", "parallel"),
            vmem_limit_bytes=64 * 1024 * 1024,
        ),
        cost_estimate=pl.CostEstimate(
            flops=2 * B * Cp * Kp * Pp,
            transcendentals=0,
            bytes_accessed=x.dtype.itemsize * (B * Cp * Kp + Pp * Kp + B * Pp * Cp),
        ),
    )(xp, wp, bp)

    # Strip padding: [B, Pp, Cp] -> [B, pred_len, C].
    return out_padded[:, :P, :C]


if __name__ == "__main__":
    # Small shapes implied by the module: enc_in (channels)=4, seq_len=8, pred_len=16
    B, enc_in, seq_len, pred_len = 2, 4, 8, 16

    key = jax.random.PRNGKey(0)
    kx, kw, kb = jax.random.split(key, 3)

    # Deterministic parameter init (mimics nn.Linear uniform(-1/sqrt(K), 1/sqrt(K)))
    bound = 1.0 / (seq_len ** 0.5)
    weight = jax.random.uniform(kw, (pred_len, seq_len), jnp.float32, -bound, bound)
    bias = jax.random.uniform(kb, (pred_len,), jnp.float32, -bound, bound)

    # Input x: [B, channels, seq_len]
    x = jax.random.normal(kx, (B, enc_in, seq_len), jnp.float32)

    # Force the Pallas path even at toy sizes so the kernel itself is exercised.
    y = linear_model_forward(x, weight, bias, force_pallas=True)
    jax.block_until_ready(y)

    # Sanity check against plain-JAX reference
    ref = jnp.swapaxes(jnp.einsum("bck,pk->bcp", x, weight) + bias, 1, 2)
    assert y.shape == (B, pred_len, enc_in), y.shape
    assert jnp.allclose(y, ref, atol=1e-5, rtol=1e-5)

    print("KERNEL_OK")
</pallas_src>

<mosaic_0001>
module attributes {stable_mosaic.version = 11 : i64} {
  func.func @_linear_kernel(%arg0: i32, %arg1: i32, %arg2: memref<1x128x128xf32, #tpu.memory_space<vmem>>, %arg3: memref<128x128xf32, #tpu.memory_space<vmem>>, %arg4: memref<128x1xf32, #tpu.memory_space<vmem>>, %arg5: memref<1x128x128xf32, #tpu.memory_space<vmem>>) attributes {dimension_semantics = [#tpu.dimension_semantics<parallel>, #tpu.dimension_semantics<parallel>], iteration_bounds = array<i64: 2, 1>, scalar_prefetch = 0 : i64, scratch_operands = 0 : i64, tpu.core_type = #tpu.core_type<tc>, window_params = [{transform_indices = @transform_0, window_bounds = array<i64: 1, 128, 128>}, {pipeline_mode = #tpu.pipeline_mode<synchronous>, transform_indices = @transform_1, window_bounds = array<i64: 128, 128>}, {pipeline_mode = #tpu.pipeline_mode<synchronous>, transform_indices = @transform_2, window_bounds = array<i64: 128, 1>}, {transform_indices = @transform_3, window_bounds = array<i64: 1, 128, 128>}]} {
    %c0 = arith.constant 0 : index
    %c0_0 = arith.constant 0 : index
    %0 = vector.load %arg3[%c0, %c0_0] : memref<128x128xf32, #tpu.memory_space<vmem>>, vector<128x128xf32>
    %c0_1 = arith.constant 0 : index
    %c0_2 = arith.constant 0 : index
    %c0_3 = arith.constant 0 : index
    %1 = vector.load %arg2[%c0_1, %c0_2, %c0_3] : memref<1x128x128xf32, #tpu.memory_space<vmem>>, vector<1x128x128xf32>
    %2 = vector.shape_cast %1 : vector<1x128x128xf32> to vector<128x128xf32>
    %cst = arith.constant dense<0.000000e+00> : vector<128x128xf32>
    %3 = tpu.matmul %0, %2, %cst {dimension_numbers = #tpu.dot_dimension_numbers<[1], [1], [0], [0], [0, 0, 1, 0], [], []>} : vector<128x128xf32>, vector<128x128xf32>, vector<128x128xf32> -> vector<128x128xf32>
    %c0_4 = arith.constant 0 : index
    %c0_5 = arith.constant 0 : index
    %4 = vector.load %arg4[%c0_4, %c0_5] : memref<128x1xf32, #tpu.memory_space<vmem>>, vector<128x1xf32>
    %5 = vector.broadcast %4 : vector<128x1xf32> to vector<128x128xf32>
    %6 = arith.addf %3, %5 : vector<128x128xf32>
    %c0_6 = arith.constant 0 : index
    %c0_7 = arith.constant 0 : index
    %c0_8 = arith.constant 0 : index
    %7 = vector.load %arg5[%c0_6, %c0_7, %c0_8] : memref<1x128x128xf32, #tpu.memory_space<vmem>>, vector<1x128x128xf32>
    %8 = vector.shape_cast %7 : vector<1x128x128xf32> to vector<128x128xf32>
    %9 = vector.shape_cast %6 : vector<128x128xf32> to vector<1x128x128xf32>
    tpu.vector_store %arg5[%c0_6, %c0_7, %c0_8], %9 {strides = array<i32>} : memref<1x128x128xf32, #tpu.memory_space<vmem>>, vector<1x128x128xf32>,
    return
  }
  func.func @transform_0(%arg0: i32, %arg1: i32) -> (i32, i32, i32) {
    %c0_i32 = arith.constant 0 : i32
    %c0_i32_0 = arith.constant 0 : i32
    return %arg0, %arg1, %c0_i32 : i32, i32, i32
  }
  func.func @transform_1(%arg0: i32, %arg1: i32) -> (i32, i32) {
    %c0_i32 = arith.constant 0 : i32
    %c0_i32_0 = arith.constant 0 : i32
    %c0_i32_1 = arith.constant 0 : i32
    return %c0_i32, %c0_i32_0 : i32, i32
  }
  func.func @transform_2(%arg0: i32, %arg1: i32) -> (i32, i32) {
    %c0_i32 = arith.constant 0 : i32
    %c0_i32_0 = arith.constant 0 : i32
    %c0_i32_1 = arith.constant 0 : i32
    return %c0_i32, %c0_i32_0 : i32, i32
  }
  func.func @transform_3(%arg0: i32, %arg1: i32) -> (i32, i32, i32) {
    %c0_i32 = arith.constant 0 : i32
    %c0_i32_0 = arith.constant 0 : i32
    return %arg0, %c0_i32, %arg1 : i32, i32, i32
  }
}

</mosaic_0001>

<llo_original>
// kernel: linear_model_forward.1
$region0: #{linear_model_forward.1}
  #allocation0 [shape = 'u32[]', space=smem, size = 0x4, offset = 0x4, fixed_abs, tag = 'smem constant byte address 0x4 - core index']
  #allocation1 [shape = 'u32[144,128]{1,0:T(1,128)}', space=vmem, size = 0x12000, scoped, tag = 'internal scratch']
  %s0 = inlined_call_operand.vmem [shape: f32[2,128,128], index: 0, kind: input, shape index: {}]
  %s1 = inlined_call_operand.vmem [shape: f32[128,128], index: 1, kind: input, shape index: {}]
  %s2 = inlined_call_operand.vmem [shape: f32[128,1], index: 2, kind: input, shape index: {}]
  %s3 = inlined_call_operand.vmem [shape: f32[2,128,128], index: 3, kind: output, shape index: {}]
  %s4 = sld [smem:[#allocation0]]
  $region45: #{linear_model_forward.1} parent=0
    _
  %s6 = ssub.s32 1, %s4
  %s7 = scalar_select 0, %s6, %s4
  loop: start=0, step=1, limit=4
  $region2: #{linear_model_forward.1} parent=0 // loop_pre_header
    _
  $region3: #{linear_model_forward.1} parent=0 // loop_header
    %s9 = sphi 0, %s13
    %p10 = scmp.ge.s32.totalorder %s9, 4
    %s16 = sphi 0, %s28
    %s17 = sphi 0, %s24
    %s18 = sphi 0, %s16
    %s19 = sphi 0, %s17
    %s20 = sphi 0, %s18
    %s21 = sphi 0, %s19
    %s33 = sphi 0, %s35
    %s36 = sphi 0, %s33
    %s37 = sphi 0, %s36
    %s53 = sphi 0, %s37
    %s57 = sphi 0, %s57
    %s59 = sphi 0, %s57
    %s60 = sphi 0, %s59
    %s74 = sphi 0, %s60
    %s78 = sphi 0, %s78
    %s80 = sphi 0, %s78
    %s81 = sphi 0, %s80
    %s95 = sphi 0, %s81
    %s103 = sphi 0, %s105
    %s106 = sphi 0, %s103
    %s107 = sphi 0, %s106
    %s123 = sphi 0, %s107
  $region4: #{linear_model_forward.1} parent=0 // loop_header_branch
    %12 = sbr.rel (%p10) target = $region8
  $region5: #{linear_model_forward.1} parent=0 // loop_body
    %s14 = ssub.s32 %s9, 1
    %s15 = ssub.s32 %s9, 2
    %s22 = sadd.s32 1, %s17
    %p23 = scmp.ge.s32.totalorder %s22, 1
    %s24 = scalar_select %p23, 0, %s22
    %s25 = sadd.s32 1, %s16
    %s26 = scalar_select %p23, %s25, %s16
    %p27 = scmp.ge.s32.totalorder %s26, 2
    %s28 = scalar_select %p27, 0, %s26
    %s29 = ssub.s32 %s16, %s28
    %s30 = ssub.s32 %s17, %s24
    %s31 = sor.u32 %s29, %s30
    %p32 = scmp.eq.s32.totalorder %s31, 0
    %s34 = sadd.s32 %s33, 1
    %s35 = scalar_select %p32, %s33, %s34
    %p38 = pneg %p32
    %p39 = scmp.eq.s32.totalorder %s9, 1
    %p40 = por %p38, %p39
    %p41 = scmp.ne.s32.totalorder %s33, %s36
    %p42 = scmp.eq.s32.totalorder %s9, 0
    %p43 = por %p41, %p42
    %p44 = scmp.ne.s32.totalorder %s33, %s36
    %p45 = scmp.eq.s32.totalorder %s14, 1
    %p46 = por %p44, %p45
    %p47 = scmp.ne.s32.totalorder %s36, %s37
    %p48 = scmp.eq.s32.totalorder %s14, 0
    %p49 = por %p47, %p48
    %p50 = scmp.ne.s32.totalorder %s36, %s37
    %p51 = scmp.eq.s32.totalorder %s15, 1
    %p52 = por %p50, %p51
    %p54 = scmp.ne.s32.totalorder %s37, %s53
    %p55 = scmp.eq.s32.totalorder %s15, 0
    %p56 = por %p54, %p55
    %s58 = sadd.s32 %s57, 1
    %p61 = scmp.eq.s32.totalorder %s9, 1
    %p62 = scmp.ne.s32.totalorder %s57, %s59
    %p63 = scmp.eq.s32.totalorder %s9, 0
    %p64 = por %p62, %p63
    %p65 = scmp.ne.s32.totalorder %s57, %s59
    %p66 = scmp.eq.s32.totalorder %s14, 1
    %p67 = por %p65, %p66
    %p68 = scmp.ne.s32.totalorder %s59, %s60
    %p69 = scmp.eq.s32.totalorder %s14, 0
    %p70 = por %p68, %p69
    %p71 = scmp.ne.s32.totalorder %s59, %s60
    %p72 = scmp.eq.s32.totalorder %s15, 1
    %p73 = por %p71, %p72
    %p75 = scmp.ne.s32.totalorder %s60, %s74
    %p76 = scmp.eq.s32.totalorder %s15, 0
    %p77 = por %p75, %p76
    %s79 = sadd.s32 %s78, 1
    %p82 = scmp.eq.s32.totalorder %s9, 1
    %p83 = scmp.ne.s32.totalorder %s78, %s80
    %p84 = scmp.eq.s32.totalorder %s9, 0
    %p85 = por %p83, %p84
    %p86 = scmp.ne.s32.totalorder %s78, %s80
    %p87 = scmp.eq.s32.totalorder %s14, 1
    %p88 = por %p86, %p87
    %p89 = scmp.ne.s32.totalorder %s80, %s81
    %p90 = scmp.eq.s32.totalorder %s14, 0
    %p91 = por %p89, %p90
    %p92 = scmp.ne.s32.totalorder %s80, %s81
    %p93 = scmp.eq.s32.totalorder %s15, 1
    %p94 = por %p92, %p93
    %p96 = scmp.ne.s32.totalorder %s81, %s95
    %p97 = scmp.eq.s32.totalorder %s15, 0
    %p98 = por %p96, %p97
    %s99 = ssub.s32 %s16, %s28
    %s100 = ssub.s32 %s17, %s24
    %s101 = sor.u32 %s99, %s100
    %p102 = scmp.eq.s32.totalorder %s101, 0
    %s104 = sadd.s32 %s103, 1
    %s105 = scalar_select %p102, %s103, %s104
    %p108 = pneg %p102
    %p109 = scmp.eq.s32.totalorder %s9, 1
    %p110 = por %p108, %p109
    %p111 = scmp.ne.s32.totalorder %s103, %s106
    %p112 = scmp.eq.s32.totalorder %s9, 0
    %p113 = por %p111, %p112
    %p114 = scmp.ne.s32.totalorder %s103, %s106
    %p115 = scmp.eq.s32.totalorder %s14, 1
    %p116 = por %p114, %p115
    %p117 = scmp.ne.s32.totalorder %s106, %s107
    %p118 = scmp.eq.s32.totalorder %s14, 0
    %p119 = por %p117, %p118
    %p120 = scmp.ne.s32.totalorder %s106, %s107
    %p121 = scmp.eq.s32.totalorder %s15, 1
    %p122 = por %p120, %p121
    %p124 = scmp.ne.s32.totalorder %s107, %s123
    %p125 = scmp.eq.s32.totalorder %s15, 0
    %p126 = por %p124, %p125
    %p127 = scmp.le.s32.totalorder 1, %s9
    %p128 = scmp.lt.s32.totalorder %s9, 3
    %p129 = pnand %p127, %p128
    %p130 = pneg %p129
    // Predicated region
    $region9: #{linear_model_forward.1} parent=5 // pred_check
      _
    $region10: #{linear_model_forward.1} parent=5 // pred_check_branch
      %132 = sbr.rel (%p129) target = $region12
    $region11: #{linear_model_forward.1} parent=5 // pred_region
      %s133 = ssub.s32 %s9, 1
      // Predicated region
      $region13: #{linear_model_forward.1} parent=11 // pred_check
        %p134 = pneg %p70
      $region14: #{linear_model_forward.1} parent=11 // pred_check_branch
        %136 = sbr.rel (%p134) target = $region16
      $region15: #{linear_model_forward.1} parent=11 // pred_region
        _
      $region16: #{linear_model_forward.1} parent=11 // pred_fallthru
        _
      // Predicated region
      $region17: #{linear_model_forward.1} parent=11 // pred_check
        %p137 = pneg %p91
      $region18: #{linear_model_forward.1} parent=11 // pred_check_branch
        %139 = sbr.rel (%p137) target = $region20
      $region19: #{linear_model_forward.1} parent=11 // pred_region
        _
      $region20: #{linear_model_forward.1} parent=11 // pred_fallthru
        _
    $region12: #{linear_model_forward.1} parent=5 // pred_fallthru
      _
    %p140 = scmp.lt.s32.totalorder %s9, 2
    // Predicated region
    $region21: #{linear_model_forward.1} parent=5 // pred_check
      %p141 = pneg %p140
    $region22: #{linear_model_forward.1} parent=5 // pred_check_branch
      %143 = sbr.rel (%p141) target = $region24
    $region23: #{linear_model_forward.1} parent=5 // pred_region
      // Predicated region
      $region25: #{linear_model_forward.1} parent=23 // pred_check
        %p144 = pneg %p43
      $region26: #{linear_model_forward.1} parent=23 // pred_check_branch
        %146 = sbr.rel (%p144) target = $region28
      $region27: #{linear_model_forward.1} parent=23 // pred_region
        %s147 = smul.u32 16, %s17
        %p148 = scmp.lt.s32.totalorder %s16, 1
        %s149 = scalar_select %p148, %s16, 1
        %p150 = scmp.lt.s32.totalorder %s147, 15
        %s151 = scalar_select %p150, %s147, 15
        %s152 = smul.addr %s149, 16
        %s153 = sadd.s32 %s151, %s152
        %s154 = smul.addr %s153, 8
        %s155 = scalar_lea.vmem %s0, %s154
        %s156 = smul.u32 16, %s17
      $region28: #{linear_model_forward.1} parent=23 // pred_fallthru
        _
    $region24: #{linear_model_forward.1} parent=5 // pred_fallthru
      _
    %p157 = scmp.le.s32.totalorder 1, %s9
    %p158 = scmp.lt.s32.totalorder %s9, 3
    %p159 = pnand %p157, %p158
    %p160 = pneg %p159
    // Predicated region
    $region29: #{linear_model_forward.1} parent=5 // pred_check
      _
    $region30: #{linear_model_forward.1} parent=5 // pred_check_branch
      %162 = sbr.rel (%p159) target = $region32
    $region31: #{linear_model_forward.1} parent=5 // pred_region
      %s163 = ssub.s32 %s9, 1
      %s164 = smul.u32 16, %s19
      %p165 = scmp.lt.s32.totalorder %s18, 1
      %s166 = scalar_select %p165, %s18, 1
      %p167 = scmp.lt.s32.totalorder %s164, 15
      %s168 = scalar_select %p167, %s164, 15
      %s169 = smul.addr %s166, 16
      %s170 = sadd.s32 %s168, %s169
      %s171 = smul.addr %s170, 8
      %s172 = scalar_lea.vmem %s0, %s171
      %p173 = pneg %p49
      %p174 = pneg %p46
      %p175 = pneg %p70
      %p176 = pneg %p67
      %p177 = pneg %p91
      %p178 = pneg %p88
      %p179 = pneg %p119
      %p180 = pneg %p116
      %p181 = scmp.lt.s32.totalorder %s18, 1
      %s182 = scalar_select %p181, %s18, 1
      %p183 = scmp.lt.s32.totalorder %s19, 0
      %s184 = scalar_select %p183, %s19, 0
      %s185 = smul.addr %s182, 16
      %s186 = sadd.s32 %s184, %s185
      %s187 = smul.addr %s186, 8
      %s188 = scalar_lea.vmem %s3, %s187
      %s189 = smul.u32 16, %s19
      %p190 = scmp.lt.s32.totalorder %s18, 1
      %s191 = scalar_select %p190, %s18, 1
      %p192 = scmp.lt.s32.totalorder %s189, 15
      %s193 = scalar_select %p192, %s189, 15
      %s194 = smul.addr %s191, 16
      %s195 = sadd.s32 %s193, %s194
      %s196 = smul.addr %s195, 8
      %s197 = scalar_lea.vmem %s0, %s196
      %s198 = smul.u32 16, %s19
      %p199 = scmp.lt.s32.totalorder %s18, 1
      %s200 = scalar_select %p199, %s18, 1
      %p201 = scmp.lt.s32.totalorder %s19, 0
      %s202 = scalar_select %p201, %s19, 0
      %s203 = smul.addr %s200, 16
      %s204 = sadd.s32 %s202, %s203
      %s205 = smul.addr %s204, 8
      %s206 = scalar_lea.vmem %s3, %s205
      %v207 = vld [vmem:[%s1] sm:$0xff]
      %v208 = vld [vmem:[%s1 + $0x8] sm:$0xff]
      %v209 = vld [vmem:[%s1 + $0x10] sm:$0xff]
      %v210 = vld [vmem:[%s1 + $0x18] sm:$0xff]
      %v211 = vld [vmem:[%s1 + $0x20] sm:$0xff]
      %v212 = vld [vmem:[%s1 + $0x28] sm:$0xff]
      %v213 = vld [vmem:[%s1 + $0x30] sm:$0xff]
      %v214 = vld [vmem:[%s1 + $0x38] sm:$0xff]
      %v215 = vld [vmem:[%s1 + $0x40] sm:$0xff]
      %v216 = vld [vmem:[%s1 + $0x48] sm:$0xff]
      %v217 = vld [vmem:[%s1 + $0x50] sm:$0xff]
      %v218 = vld [vmem:[%s1 + $0x58] sm:$0xff]
      %v219 = vld [vmem:[%s1 + $0x60] sm:$0xff]
      %v220 = vld [vmem:[%s1 + $0x68] sm:$0xff]
      %v221 = vld [vmem:[%s1 + $0x70] sm:$0xff]
      %v222 = vld [vmem:[%s1 + $0x78] sm:$0xff]
      %v223 = vld [vmem:[%s197] sm:$0xff]
      %v224 = vld [vmem:[%s197 + $0x8] sm:$0xff]
      %v225 = vld [vmem:[%s197 + $0x10] sm:$0xff]
      %v226 = vld [vmem:[%s197 + $0x18] sm:$0xff]
      %v227 = vld [vmem:[%s197 + $0x20] sm:$0xff]
      %v228 = vld [vmem:[%s197 + $0x28] sm:$0xff]
      %v229 = vld [vmem:[%s197 + $0x30] sm:$0xff]
      %v230 = vld [vmem:[%s197 + $0x38] sm:$0xff]
      %v231 = vld [vmem:[%s197 + $0x40] sm:$0xff]
      %v232 = vld [vmem:[%s197 + $0x48] sm:$0xff]
      %v233 = vld [vmem:[%s197 + $0x50] sm:$0xff]
      %v234 = vld [vmem:[%s197 + $0x58] sm:$0xff]
      %v235 = vld [vmem:[%s197 + $0x60] sm:$0xff]
      %v236 = vld [vmem:[%s197 + $0x68] sm:$0xff]
      %v237 = vld [vmem:[%s197 + $0x70] sm:$0xff]
      %v238 = vld [vmem:[%s197 + $0x78] sm:$0xff]
      %v239 = vld [vmem:[%s2] sm:$0xff]
      %v240 = vld [vmem:[%s2 + $0x8] sm:$0xff]
      %v241 = vld [vmem:[%s2 + $0x10] sm:$0xff]
      %v242 = vld [vmem:[%s2 + $0x18] sm:$0xff]
      %v243 = vld [vmem:[%s2 + $0x20] sm:$0xff]
      %v244 = vld [vmem:[%s2 + $0x28] sm:$0xff]
      %v245 = vld [vmem:[%s2 + $0x30] sm:$0xff]
      %v246 = vld [vmem:[%s2 + $0x38] sm:$0xff]
      %v247 = vld [vmem:[%s2 + $0x40] sm:$0xff]
      %v248 = vld [vmem:[%s2 + $0x48] sm:$0xff]
      %v249 = vld [vmem:[%s2 + $0x50] sm:$0xff]
      %v250 = vld [vmem:[%s2 + $0x58] sm:$0xff]
      %v251 = vld [vmem:[%s2 + $0x60] sm:$0xff]
      %v252 = vld [vmem:[%s2 + $0x68] sm:$0xff]
      %v253 = vld [vmem:[%s2 + $0x70] sm:$0xff]
      %v254 = vld [vmem:[%s2 + $0x78] sm:$0xff]
      %256 = vset.pattern.permute.xlu0 0
      %257 = vperm.xlu0 %256, %v239
      %v258 = vpop.permute.xlu0 %257
      %261 = vset.pattern.permute.xlu0 0
      %262 = vperm.xlu0 %261, %v240
      %v263 = vpop.permute.xlu0 %262
      %266 = vset.pattern.permute.xlu0 0
      %267 = vperm.xlu0 %266, %v241
      %v268 = vpop.permute.xlu0 %267
      %271 = vset.pattern.permute.xlu0 0
      %272 = vperm.xlu0 %271, %v242
      %v273 = vpop.permute.xlu0 %272
      %276 = vset.pattern.permute.xlu0 0
      %277 = vperm.xlu0 %276, %v243
      %v278 = vpop.permute.xlu0 %277
      %281 = vset.pattern.permute.xlu0 0
      %282 = vperm.xlu0 %281, %v244
      %v283 = vpop.permute.xlu0 %282
      %286 = vset.pattern.permute.xlu0 0
      %287 = vperm.xlu0 %286, %v245
      %v288 = vpop.permute.xlu0 %287
      %291 = vset.pattern.permute.xlu0 0
      %292 = vperm.xlu0 %291, %v246
      %v293 = vpop.permute.xlu0 %292
      %296 = vset.pattern.permute.xlu0 0
      %297 = vperm.xlu0 %296, %v247
      %v298 = vpop.permute.xlu0 %297
      %301 = vset.pattern.permute.xlu0 0
      %302 = vperm.xlu0 %301, %v248
      %v303 = vpop.permute.xlu0 %302
      %306 = vset.pattern.permute.xlu0 0
      %307 = vperm.xlu0 %306, %v249
      %v308 = vpop.permute.xlu0 %307
      %311 = vset.pattern.permute.xlu0 0
      %312 = vperm.xlu0 %311, %v250
      %v313 = vpop.permute.xlu0 %312
      %316 = vset.pattern.permute.xlu0 0
      %317 = vperm.xlu0 %316, %v251
      %v318 = vpop.permute.xlu0 %317
      %321 = vset.pattern.permute.xlu0 0
      %322 = vperm.xlu0 %321, %v252
      %v323 = vpop.permute.xlu0 %322
      %326 = vset.pattern.permute.xlu0 0
      %327 = vperm.xlu0 %326, %v253
      %v328 = vpop.permute.xlu0 %327
      %331 = vset.pattern.permute.xlu0 0
      %332 = vperm.xlu0 %331, %v254
      %v333 = vpop.permute.xlu0 %332
      %335 = vmatprep.subr.mxu0 0.0
      %336 = vmatpush1.xpose.msra.mxu0 %v238
      %337 = vmatprep.subr.mxu0 0.0
      %338 = vmatpush1.xpose.msra.mxu0 %v237
      %339 = vmatprep.subr.mxu0 0.0
      %340 = vmatpush1.xpose.msra.mxu0 %v236
      %341 = vmatprep.subr.mxu0 0.0
      %342 = vmatpush1.xpose.msra.mxu0 %v235
      %343 = vmatprep.subr.mxu0 0.0
      %344 = vmatpush1.xpose.msra.mxu0 %v234
      %345 = vmatprep.subr.mxu0 0.0
      %346 = vmatpush1.xpose.msra.mxu0 %v233
      %347 = vmatprep.subr.mxu0 0.0
      %348 = vmatpush1.xpose.msra.mxu0 %v232
      %349 = vmatprep.subr.mxu0 0.0
      %350 = vmatpush1.xpose.msra.mxu0 %v231
      %351 = vmatprep.subr.mxu0 0.0
      %352 = vmatpush1.xpose.msra.mxu0 %v230
      %353 = vmatprep.subr.mxu0 0.0
      %354 = vmatpush1.xpose.msra.mxu0 %v229
      %355 = vmatprep.subr.mxu0 0.0
      %356 = vmatpush1.xpose.msra.mxu0 %v228
      %357 = vmatprep.subr.mxu0 0.0
      %358 = vmatpush1.xpose.msra.mxu0 %v227
      %359 = vmatprep.subr.mxu0 0.0
      %360 = vmatpush1.xpose.msra.mxu0 %v226
      %361 = vmatprep.subr.mxu0 0.0
      %362 = vmatpush1.xpose.msra.mxu0 %v225
      %363 = vmatprep.subr.mxu0 0.0
      %364 = vmatpush1.xpose.msra.mxu0 %v224
      %365 = vmatprep.subr.mxu0 0.0
      %366 = vmatpush1.xpose.msra.mxu0 %v223
      %367 = vmatprep.subr.mxu0 0.0
      %368 = vmatpush2.xpose.msra.mxu0 0.0
      %369 = vmatprep.subr.mxu0 0.0
      %370 = vmatpush2.xpose.msra.mxu0 0.0
      %371 = vmatprep.subr.mxu0 0.0
      %372 = vmatpush2.xpose.msra.mxu0 0.0
      %373 = vmatprep.subr.mxu0 0.0
      %374 = vmatpush2.xpose.msra.mxu0 0.0
      %375 = vmatprep.subr.mxu0 0.0
      %376 = vmatpush2.xpose.msra.mxu0 0.0
      %377 = vmatprep.subr.mxu0 0.0
      %378 = vmatpush2.xpose.msra.mxu0 0.0
      %379 = vmatprep.subr.mxu0 0.0
      %380 = vmatpush2.xpose.msra.mxu0 0.0
      %381 = vmatprep.subr.mxu0 0.0
      %382 = vmatpush2.xpose.msra.mxu0 0.0
      %383 = vmatprep.subr.mxu0 0.0
      %384 = vmatpush2.xpose.msra.mxu0 0.0
      %385 = vmatprep.subr.mxu0 0.0
      %386 = vmatpush2.xpose.msra.mxu0 0.0
      %387 = vmatprep.subr.mxu0 0.0
      %388 = vmatpush2.xpose.msra.mxu0 0.0
      %389 = vmatprep.subr.mxu0 0.0
      %390 = vmatpush2.xpose.msra.mxu0 0.0
      %391 = vmatprep.subr.mxu0 0.0
      %392 = vmatpush2.xpose.msra.mxu0 0.0
      %393 = vmatprep.subr.mxu0 0.0
      %394 = vmatpush2.xpose.msra.mxu0 0.0
      %395 = vmatprep.subr.mxu0 0.0
      %396 = vmatpush2.xpose.msra.mxu0 0.0
      %397 = vmatprep.subr.mxu0 0.0
      %398 = vmatpush2.xpose.msra.mxu0 0.0
      %399 = vmatprep.mubr.f32.mxu0 0.0
      %400 = vmatmul.mubr.f32.gmra.mxu0 %v207
      %v401 = vpop.f32.mrf.mxu0
      %v402 = vadd.f32 %v258, %v401
      %v403 = vpop.f32.mrf.mxu0
      %404 = vmatprep.mubr.f32.mxu0 0.0
      %405 = vmatmul.mubr.f32.gmra.mxu0 %v208
      %v406 = vpop.f32.mrf.mxu0
      %v407 = vadd.f32 %v263, %v406
      %v408 = vpop.f32.mrf.mxu0
      %409 = vmatprep.mubr.f32.mxu0 0.0
      %410 = vmatmul.mubr.f32.gmra.mxu0 %v209
      %v411 = vpop.f32.mrf.mxu0
      %v412 = vadd.f32 %v268, %v411
      %v413 = vpop.f32.mrf.mxu0
      %414 = vmatprep.mubr.f32.mxu0 0.0
      %415 = vmatmul.mubr.f32.gmra.mxu0 %v210
      %v416 = vpop.f32.mrf.mxu0
      %v417 = vadd.f32 %v273, %v416
      %v418 = vpop.f32.mrf.mxu0
      %419 = vmatprep.mubr.f32.mxu0 0.0
      %420 = vmatmul.mubr.f32.gmra.mxu0 %v211
      %v421 = vpop.f32.mrf.mxu0
      %v422 = vadd.f32 %v278, %v421
      %v423 = vpop.f32.mrf.mxu0
      %424 = vmatprep.mubr.f32.mxu0 0.0
      %425 = vmatmul.mubr.f32.gmra.mxu0 %v212
      %v426 = vpop.f32.mrf.mxu0
      %v427 = vadd.f32 %v283, %v426
      %v428 = vpop.f32.mrf.mxu0
      %429 = vmatprep.mubr.f32.mxu0 0.0
      %430 = vmatmul.mubr.f32.gmra.mxu0 %v213
      %v431 = vpop.f32.mrf.mxu0
      %v432 = vadd.f32 %v288, %v431
      %v433 = vpop.f32.mrf.mxu0
      %434 = vmatprep.mubr.f32.mxu0 0.0
      %435 = vmatmul.mubr.f32.gmra.mxu0 %v214
      %v436 = vpop.f32.mrf.mxu0
      %v437 = vadd.f32 %v293, %v436
      %v438 = vpop.f32.mrf.mxu0
      %439 = vmatprep.mubr.f32.mxu0 0.0
      %440 = vmatmul.mubr.f32.gmra.mxu0 %v215
      %v441 = vpop.f32.mrf.mxu0
      %v442 = vadd.f32 %v298, %v441
      %v443 = vpop.f32.mrf.mxu0
      %444 = vmatprep.mubr.f32.mxu0 0.0
      %445 = vmatmul.mubr.f32.gmra.mxu0 %v216
      %v446 = vpop.f32.mrf.mxu0
      %v447 = vadd.f32 %v303, %v446
      %v448 = vpop.f32.mrf.mxu0
      %449 = vmatprep.mubr.f32.mxu0 0.0
      %450 = vmatmul.mubr.f32.gmra.mxu0 %v217
      %v451 = vpop.f32.mrf.mxu0
      %v452 = vadd.f32 %v308, %v451
      %v453 = vpop.f32.mrf.mxu0
      %454 = vmatprep.mubr.f32.mxu0 0.0
      %455 = vmatmul.mubr.f32.gmra.mxu0 %v218
      %v456 = vpop.f32.mrf.mxu0
      %v457 = vadd.f32 %v313, %v456
      %v458 = vpop.f32.mrf.mxu0
      %459 = vmatprep.mubr.f32.mxu0 0.0
      %460 = vmatmul.mubr.f32.gmra.mxu0 %v219
      %v461 = vpop.f32.mrf.mxu0
      %v462 = vadd.f32 %v318, %v461
      %v463 = vpop.f32.mrf.mxu0
      %464 = vmatprep.mubr.f32.mxu0 0.0
      %465 = vmatmul.mubr.f32.gmra.mxu0 %v220
      %v466 = vpop.f32.mrf.mxu0
      %v467 = vadd.f32 %v323, %v466
      %v468 = vpop.f32.mrf.mxu0
      %469 = vmatprep.mubr.f32.mxu0 0.0
      %470 = vmatmul.mubr.f32.gmra.mxu0 %v221
      %v471 = vpop.f32.mrf.mxu0
      %v472 = vadd.f32 %v328, %v471
      %v473 = vpop.f32.mrf.mxu0
      %474 = vmatprep.mubr.f32.mxu0 0.0
      %475 = vmatmul.mubr.f32.gmra.mxu0 %v222
      %v476 = vpop.f32.mrf.mxu0
      %v477 = vadd.f32 %v333, %v476
      %v478 = vpop.f32.mrf.mxu0
      %479 = vdwg.mxu0
      %480 = vst [vmem:[%s206] sm:$0xff] %v402
      %481 = vst [vmem:[%s206 + $0x8] sm:$0xff] %v407
      %482 = vst [vmem:[%s206 + $0x10] sm:$0xff] %v412
      %483 = vst [vmem:[%s206 + $0x18] sm:$0xff] %v417
      %484 = vst [vmem:[%s206 + $0x20] sm:$0xff] %v422
      %485 = vst [vmem:[%s206 + $0x28] sm:$0xff] %v427
      %486 = vst [vmem:[%s206 + $0x30] sm:$0xff] %v432
      %487 = vst [vmem:[%s206 + $0x38] sm:$0xff] %v437
      %488 = vst [vmem:[%s206 + $0x40] sm:$0xff] %v442
      %489 = vst [vmem:[%s206 + $0x48] sm:$0xff] %v447
      %490 = vst [vmem:[%s206 + $0x50] sm:$0xff] %v452
      %491 = vst [vmem:[%s206 + $0x58] sm:$0xff] %v457
      %492 = vst [vmem:[%s206 + $0x60] sm:$0xff] %v462
      %493 = vst [vmem:[%s206 + $0x68] sm:$0xff] %v467
      %494 = vst [vmem:[%s206 + $0x70] sm:$0xff] %v472
      %495 = vst [vmem:[%s206 + $0x78] sm:$0xff] %v477
      %p496 = scmp.lt.s32.totalorder %s18, 1
      %s497 = scalar_select %p496, %s18, 1
      %p498 = scmp.lt.s32.totalorder %s19, 0
      %s499 = scalar_select %p498, %s19, 0
      %s500 = smul.addr %s497, 16
      %s501 = sadd.s32 %s499, %s500
      %s502 = smul.addr %s501, 8
      %s503 = scalar_lea.vmem %s3, %s502
      // Predicated region
      $region33: #{linear_model_forward.1} parent=31 // pred_check
        %p504 = pneg %p116
      $region34: #{linear_model_forward.1} parent=31 // pred_check_branch
        %506 = sbr.rel (%p504) target = $region36
      $region35: #{linear_model_forward.1} parent=31 // pred_region
        _
      $region36: #{linear_model_forward.1} parent=31 // pred_fallthru
        _
    $region32: #{linear_model_forward.1} parent=5 // pred_fallthru
      _
    %p507 = scmp.le.s32.totalorder 2, %s9
    // Predicated region
    $region37: #{linear_model_forward.1} parent=5 // pred_check
      %p508 = pneg %p507
    $region38: #{linear_model_forward.1} parent=5 // pred_check_branch
      %510 = sbr.rel (%p508) target = $region40
    $region39: #{linear_model_forward.1} parent=5 // pred_region
      %s511 = ssub.s32 %s9, 2
      // Predicated region
      $region41: #{linear_model_forward.1} parent=39 // pred_check
        %p512 = pneg %p122
      $region42: #{linear_model_forward.1} parent=39 // pred_check_branch
        %514 = sbr.rel (%p512) target = $region44
      $region43: #{linear_model_forward.1} parent=39 // pred_region
        %p515 = scmp.lt.s32.totalorder %s20, 1
        %s516 = scalar_select %p515, %s20, 1
        %p517 = scmp.lt.s32.totalorder %s21, 0
        %s518 = scalar_select %p517, %s21, 0
        %s519 = smul.addr %s516, 16
        %s520 = sadd.s32 %s518, %s519
        %s521 = smul.addr %s520, 8
        %s522 = scalar_lea.vmem %s3, %s521
      $region44: #{linear_model_forward.1} parent=39 // pred_fallthru
        _
    $region40: #{linear_model_forward.1} parent=5 // pred_fallthru
      _
  $region6: #{linear_model_forward.1} parent=0 // loop_footer
    %s13 = sadd.s32 1, %s9
  $region7: #{linear_model_forward.1} parent=0 // loop_footer_branch
    %8 = sbr.rel target = $region3
  $region8: #{linear_model_forward.1} parent=0 // loop_exit
    _

</llo_original>
